<compile_context>
chip_gen: v7x
topology: tpu7x:2x2x1
jax: 0.10.0
libtpu: 0.0.40
codegen_flags: <defaults>
</compile_context>

<pallas_src>
import math

import jax
import jax.numpy as jnp
from jax.experimental import pallas as pl
from jax.experimental.pallas import tpu as pltpu


def _round_up(v, m):
    return (v + m - 1) // m * m


def _pick_tile(dim, candidates):
    for c in candidates:
        if dim % c == 0:
            return c
    return candidates[-1]


# ----------------------------- Pallas kernels ---------------------------------

def _linear_bias_kernel(x_ref, w_ref, b_ref, o_ref):
    # x_ref: (tm, tk) bf16/f32   w_ref: (tk, tn) bf16/f32
    # b_ref: (1, tn) f32         o_ref: (tm, tn) f32  (VMEM-resident across K)
    k = pl.program_id(2)
    prod = jnp.dot(x_ref[...], w_ref[...], preferred_element_type=jnp.float32)

    @pl.when(k == 0)
    def _first():
        o_ref[...] = prod + b_ref[...]          # bias fused into the first step

    @pl.when(k > 0)
    def _accum():
        o_ref[...] += prod


def _linear_nobias_kernel(x_ref, w_ref, o_ref):
    k = pl.program_id(2)
    prod = jnp.dot(x_ref[...], w_ref[...], preferred_element_type=jnp.float32)

    @pl.when(k == 0)
    def _first():
        o_ref[...] = prod

    @pl.when(k > 0)
    def _accum():
        o_ref[...] += prod


def _pallas_linear(x2d, wT, b2d, *, tm, tn, tk):
    """x2d: (Mp, Kp), wT: (Kp, Np), b2d: (1, Np) f32 or None -> (Mp, Np) f32.

    Mp/Kp must be multiples of tm/tk; Np a multiple of tn.
    """
    Mp, Kp = x2d.shape
    Kp_w, Np = wT.shape
    assert Kp_w == Kp
    assert Mp % tm == 0 and Np % tn == 0 and Kp % tk == 0

    grid_m, grid_n, grid_k = Mp // tm, Np // tn, Kp // tk

    # v7x has 2 TensorCores sharded over the 'parallel' grid axes; guarantee at
    # least one parallel axis has >=2 blocks when possible (no effect v5e/v6e).
    if grid_m == 1 and grid_n == 1 and tn >= 256:
        tn //= 2
        grid_n = Np // tn

    x_spec = pl.BlockSpec((tm, tk), lambda i, j, k: (i, k))
    w_spec = pl.BlockSpec((tk, tn), lambda i, j, k: (k, j))
    o_spec = pl.BlockSpec((tm, tn), lambda i, j, k: (i, j))

    op_bytes = jnp.dtype(x2d.dtype).itemsize
    w_bytes = jnp.dtype(wT.dtype).itemsize
    out_bytes = 4
    bytes_accessed = (grid_n * Mp * Kp * op_bytes     # x re-read once per N tile
                      + grid_m * Np * Kp * w_bytes    # w re-read once per M tile
                      + Mp * Np * out_bytes)          # output writeback
    if b2d is not None:
        bytes_accessed += int(b2d.size) * 4
    cost = pl.CostEstimate(flops=2 * Mp * Np * Kp, transcendentals=0,
                           bytes_accessed=bytes_accessed)

    # Scoped-VMEM limit derived from the double-buffered tile footprint; cap at
    # 64 MiB so the same setting is safe on v7x (64 MiB physical VMEM).
    footprint = (2 * (tm * tk * op_bytes + tk * tn * w_bytes)   # 2x-buffered inputs
                 + 2 * tm * tn * out_bytes                      # 2x-buffered output
                 + 2 * tn * 4)                                  # bias
    vmem_limit = min(64 * 1024 * 1024,
                     max(32 * 1024 * 1024, int(footprint * 1.5)))

    cparams = pltpu.CompilerParams(
        dimension_semantics=("parallel", "parallel", "arbitrary"),
        vmem_limit_bytes=vmem_limit,
    )

    if b2d is not None:
        kernel = _linear_bias_kernel
        in_specs = [x_spec, w_spec, pl.BlockSpec((1, tn), lambda i, j, k: (0, j))]
        args = (x2d, wT, b2d)
    else:
        kernel = _linear_nobias_kernel
        in_specs = [x_spec, w_spec]
        args = (x2d, wT)

    return pl.pallas_call(
        kernel,
        out_shape=jax.ShapeDtypeStruct((Mp, Np), jnp.float32),
        grid_spec=pltpu.PrefetchScalarGridSpec(
            num_scalar_prefetch=0,
            grid=(grid_m, grid_n, grid_k),
            in_specs=in_specs,
            out_specs=o_spec,
        ),
        compiler_params=cparams,
        cost_estimate=cost,
    )(*args)


# ----------------------- TensorCoreLinear (JAX port) --------------------------

class TensorCoreLinearJAX:
    """JAX/Pallas port of TensorCoreLinear. Parameters are plain jnp arrays."""

    def __init__(self, in_features, out_features, bias=True, precision="fp16",
                 key=None):
        self.in_features = in_features
        self.out_features = out_features
        self.has_bias = bias
        self.precision = precision

        # Torch-style storage alignment (8 for fp16, 16 for int8).
        alignment = 16 if precision == "int8" else 8
        self.aligned_in_features = _round_up(in_features, alignment)
        self.aligned_out_features = _round_up(out_features, alignment)

        if key is None:
            key = jax.random.PRNGKey(0)
        kw, kb = jax.random.split(key)

        # kaiming_uniform_(a=sqrt(5)) on the [:out, :in] slice
        # -> U(-1/sqrt(fan_in), 1/sqrt(fan_in))
        fan_in = in_features
        w_bound = 1.0 / math.sqrt(fan_in) if fan_in > 0 else 0.0
        weight = jnp.zeros((self.aligned_out_features, self.aligned_in_features),
                           dtype=jnp.float32)
        w_init = jax.random.uniform(kw, (out_features, in_features),
                                    minval=-w_bound, maxval=w_bound,
                                    dtype=jnp.float32)
        self.weight = weight.at[:out_features, :in_features].set(w_init)

        if bias:
            b_bound = 1.0 / math.sqrt(fan_in) if fan_in > 0 else 0.0
            b = jnp.zeros((self.aligned_out_features,), dtype=jnp.float32)
            b_init = jax.random.uniform(kb, (out_features,),
                                        minval=-b_bound, maxval=b_bound,
                                        dtype=jnp.float32)
            self.bias = b.at[:out_features].set(b_init)
        else:
            self.bias = None

        # TODO(synk): the torch 'int8' path has no distinct compute (it falls
        # through to the same fp32 matmul); a real int8 path would need per-
        # generation handling (int8 MXU on v5e/v6e, fp8-only MXU on v7x).
        self._build_kernel_params()

    # Precompute & cache the sliced, quantized, transposed, 128-padded operands.
    def _build_kernel_params(self):
        N, K = self.out_features, self.in_features
        Np = _round_up(N, 128)           # lane-dense output / weight columns
        Kp = _round_up(K, 128)           # lane-dense contraction dim

        w = self.weight[:N, :K]
        if self.precision == "fp16":
            # Emulate torch fp16 autocast rounding, then feed the MXU bf16 (TPU
            # has no fp16 MXU mode).  Intentional bf16-level numeric deviation.
            w_q = w.astype(jnp.float16).astype(jnp.bfloat16)
            op_dtype = jnp.bfloat16
        else:
            w_q = w.astype(jnp.float32)
            op_dtype = jnp.float32

        # Pre-transposed (Kp, Np): kernel runs a plain (tm,tk)@(tk,tn) dot, so
        # the weight's lane dim matches the output lane dim (no MXU-feed transposes).
        wT = jnp.zeros((Kp, Np), dtype=op_dtype).at[:K, :N].set(w_q.T)
        self._w_kernel = wT

        if self.bias is not None:
            b = self.bias[:N]
            if self.precision == "fp16":
                b = b.astype(jnp.float16)
            b = b.astype(jnp.float32)
            self._b_kernel = jnp.zeros((1, Np), dtype=jnp.float32).at[0, :N].set(b)
        else:
            self._b_kernel = None

        self._Np, self._Kp = Np, Kp
        self._op_dtype = op_dtype
        self._tn = _pick_tile(Np, (512, 256, 128))
        self._tk = _pick_tile(Kp, (2048, 1024, 512, 256, 128))

    def __call__(self, x):
        original_shape = x.shape
        input_dtype = x.dtype
        K = self.in_features
        N = self.out_features

        x2d = x.reshape(-1, original_shape[-1])
        M = x2d.shape[0]

        # fp16 autocast emulation (rounding) + bf16 for the MXU; the cast and the
        # padding below fuse into one XLA pass over x.
        if self.precision == "fp16":
            x_q = x2d.astype(jnp.float16).astype(jnp.bfloat16)
        else:
            x_q = x2d.astype(jnp.float32)

        # tm from a fixed bucket (bounded recompiles); padding bounded < one tile.
        tm = 512 if M >= 512 else (256 if M >= 256 else 128)
        Mp = _round_up(M, tm)
        pad_m = Mp - M
        pad_k = self._Kp - K
        if pad_m or pad_k:
            x_q = jnp.pad(x_q, ((0, pad_m), (0, pad_k)))

        out = _pallas_linear(x_q, self._w_kernel, self._b_kernel,
                             tm=tm, tn=self._tn, tk=self._tk)

        out = out[:M, :N]
        if self.precision == "fp16":
            out = out.astype(jnp.float16)       # torch-style fp16 output rounding
        out = out.astype(input_dtype)
        return out.reshape(tuple(original_shape[:-1]) + (N,))


# ---------------------------------- main ---------------------------------------

if __name__ == "__main__":
    key = jax.random.PRNGKey(0)
    k_x, k_p = jax.random.split(key)

    batch, seq, in_features, out_features = 2, 8, 32, 64
    x = jax.random.normal(k_x, (batch, seq, in_features), dtype=jnp.float32)

    layer = TensorCoreLinearJAX(in_features, out_features, bias=True,
                                precision="fp16", key=k_p)

    y = layer(x)
    y = jax.block_until_ready(y)

    assert y.shape == (batch, seq, out_features), y.shape
    assert y.dtype == x.dtype, y.dtype

    # Reference #1: exactly what the kernel computes (fp16-rounded operands fed
    # to the MXU as bf16, f32 accumulate, bias in f32, fp16 output rounding).
    x_q = x.astype(jnp.float16).astype(jnp.bfloat16).astype(jnp.float32)
    w_q = (layer.weight[:out_features, :in_features]
           .astype(jnp.float16).astype(jnp.bfloat16).astype(jnp.float32))
    b_q = layer.bias[:out_features].astype(jnp.float16).astype(jnp.float32)
    ref_bf16 = (x_q.reshape(-1, in_features) @ w_q.T + b_q).astype(jnp.float16)
    ref_bf16 = ref_bf16.astype(jnp.float32).reshape(batch, seq, out_features)
    assert jnp.allclose(y, ref_bf16, atol=1e-2, rtol=1e-2), \
        float(jnp.max(jnp.abs(y - ref_bf16)))

    # Reference #2: the original torch fp16-autocast semantics.  The bf16 MXU
    # path intentionally deviates at the bf16-mantissa level; loose tolerance.
    x_h = x.astype(jnp.float16).astype(jnp.float32)
    w_h = layer.weight[:out_features, :in_features].astype(jnp.float16).astype(jnp.float32)
    ref_fp16 = (x_h.reshape(-1, in_features) @ w_h.T + b_q).astype(jnp.float16)
    ref_fp16 = ref_fp16.astype(jnp.float32).reshape(batch, seq, out_features)
    assert jnp.allclose(y, ref_fp16, atol=1e-1, rtol=1e-1), \
        float(jnp.max(jnp.abs(y - ref_fp16)))

    print("KERNEL_OK")
</pallas_src>

<mosaic_0001>
module attributes {stable_mosaic.version = 11 : i64} {
  func.func @_linear_bias_kernel(%arg0: i32, %arg1: i32, %arg2: i32, %arg3: memref<128x128xbf16, #tpu.memory_space<vmem>>, %arg4: memref<128x128xbf16, #tpu.memory_space<vmem>>, %arg5: memref<1x128xf32, #tpu.memory_space<vmem>>, %arg6: memref<128x128xf32, #tpu.memory_space<vmem>>) attributes {dimension_semantics = [#tpu.dimension_semantics<parallel>, #tpu.dimension_semantics<parallel>, #tpu.dimension_semantics<arbitrary>], iteration_bounds = array<i64: 1, 1, 1>, scalar_prefetch = 0 : i64, scratch_operands = 0 : i64, tpu.core_type = #tpu.core_type<tc>, window_params = [{transform_indices = @transform_0, window_bounds = array<i64: 128, 128>}, {transform_indices = @transform_1, window_bounds = array<i64: 128, 128>}, {transform_indices = @transform_2, window_bounds = array<i64: 1, 128>}, {transform_indices = @transform_3, window_bounds = array<i64: 128, 128>}]} {
    %c0 = arith.constant 0 : index
    %c0_0 = arith.constant 0 : index
    %0 = vector.load %arg3[%c0, %c0_0] : memref<128x128xbf16, #tpu.memory_space<vmem>>, vector<128x128xbf16>
    %c0_1 = arith.constant 0 : index
    %c0_2 = arith.constant 0 : index
    %1 = vector.load %arg4[%c0_1, %c0_2] : memref<128x128xbf16, #tpu.memory_space<vmem>>, vector<128x128xbf16>
    %cst = arith.constant dense<0.000000e+00> : vector<128x128xf32>
    %2 = tpu.matmul %0, %1, %cst {dimension_numbers = #tpu.dot_dimension_numbers<[1], [0], [0], [1], [0, 0, 1, 1], [], []>} : vector<128x128xbf16>, vector<128x128xbf16>, vector<128x128xf32> -> vector<128x128xf32>
    %c0_i32 = arith.constant 0 : i32
    %3 = arith.cmpi eq, %arg2, %c0_i32 : i32
    %4 = arith.extui %3 : i1 to i32
    %c0_i32_3 = arith.constant 0 : i32
    %5 = arith.cmpi ne, %4, %c0_i32_3 : i32
    scf.if %5 {
      %c0_6 = arith.constant 0 : index
      %c0_7 = arith.constant 0 : index
      %9 = vector.load %arg5[%c0_6, %c0_7] : memref<1x128xf32, #tpu.memory_space<vmem>>, vector<1x128xf32>
      %10 = vector.broadcast %9 : vector<1x128xf32> to vector<128x128xf32>
      %11 = arith.addf %2, %10 : vector<128x128xf32>
      %c0_8 = arith.constant 0 : index
      %c0_9 = arith.constant 0 : index
      %12 = vector.load %arg6[%c0_8, %c0_9] : memref<128x128xf32, #tpu.memory_space<vmem>>, vector<128x128xf32>
      tpu.vector_store %arg6[%c0_8, %c0_9], %11 {strides = array<i32>} : memref<128x128xf32, #tpu.memory_space<vmem>>, vector<128x128xf32>,
    } else {
    }
    %c0_i32_4 = arith.constant 0 : i32
    %6 = arith.cmpi sgt, %arg2, %c0_i32_4 : i32
    %7 = arith.extui %6 : i1 to i32
    %c0_i32_5 = arith.constant 0 : i32
    %8 = arith.cmpi ne, %7, %c0_i32_5 : i32
    scf.if %8 {
      %c0_6 = arith.constant 0 : index
      %c0_7 = arith.constant 0 : index
      %9 = vector.load %arg6[%c0_6, %c0_7] : memref<128x128xf32, #tpu.memory_space<vmem>>, vector<128x128xf32>
      %10 = arith.addf %9, %2 : vector<128x128xf32>
      %c0_8 = arith.constant 0 : index
      %c0_9 = arith.constant 0 : index
      %11 = vector.load %arg6[%c0_8, %c0_9] : memref<128x128xf32, #tpu.memory_space<vmem>>, vector<128x128xf32>
      tpu.vector_store %arg6[%c0_8, %c0_9], %10 {strides = array<i32>} : memref<128x128xf32, #tpu.memory_space<vmem>>, vector<128x128xf32>,
    } else {
    }
    return
  }
  func.func @transform_0(%arg0: i32, %arg1: i32, %arg2: i32) -> (i32, i32) {
    %c0_i32 = arith.constant 0 : i32
    return %arg0, %arg2 : i32, i32
  }
  func.func @transform_1(%arg0: i32, %arg1: i32, %arg2: i32) -> (i32, i32) {
    %c0_i32 = arith.constant 0 : i32
    return %arg2, %arg1 : i32, i32
  }
  func.func @transform_2(%arg0: i32, %arg1: i32, %arg2: i32) -> (i32, i32) {
    %c0_i32 = arith.constant 0 : i32
    %c0_i32_0 = arith.constant 0 : i32
    return %c0_i32, %arg1 : i32, i32
  }
  func.func @transform_3(%arg0: i32, %arg1: i32, %arg2: i32) -> (i32, i32) {
    %c0_i32 = arith.constant 0 : i32
    return %arg0, %arg1 : i32, i32
  }
}

</mosaic_0001>

<llo_original>
// kernel: tpu_custom_call.1
$region0: #{tpu_custom_call.1}
  #allocation0 [shape = 'u32[]', space=smem, size = 0x4, offset = 0x4, fixed_abs, tag = 'smem constant byte address 0x4 - core index']
  #allocation1 [shape = 'u32[144,128]{1,0:T(1,128)}', space=vmem, size = 0x12000, scoped, tag = 'internal scratch']
  %s0 = inlined_call_operand.hbm [shape: bf16[128,128], index: 0, kind: input, shape index: {}]
  %s1 = inlined_call_operand.hbm [shape: bf16[128,128], index: 1, kind: input, shape index: {}]
  %s2 = inlined_call_operand.vmem [shape: f32[1,128], index: 2, kind: input, shape index: {}]
  %s3 = inlined_call_operand.hbm [shape: f32[128,128], index: 3, kind: output, shape index: {}]
  %s4 = sld [smem:[#allocation0]]
  $region38: #{tpu_custom_call.1} parent=0
    _
  %s6 = ssub.s32 1, %s4
  %s7 = scalar_select 0, %s6, %s4
  $region1: #{tpu_custom_call.1} parent=0
    #allocation2 [shape = 'u8[32768]{0}', space=vmem, size = 0x8000, scoped, tag = 'input window, operand 0, single buffered']
    #allocation3 [shape = 's32[1]{0}', space=sflag, size = 0x4, scoped, tag = 'scoped memory for tpu_custom_call.1']
    #allocation4 [shape = 's32[1]{0}', space=sflag, size = 0x4, scoped, tag = 'scoped memory for tpu_custom_call.1']
    #allocation5 [shape = 'u8[32768]{0}', space=vmem, size = 0x8000, scoped, tag = 'input window, operand 1, single buffered']
    #allocation6 [shape = 's32[1]{0}', space=sflag, size = 0x4, scoped, tag = 'scoped memory for tpu_custom_call.1']
    #allocation7 [shape = 'u8[65536]{0}', space=vmem, size = 0x10000, scoped, tag = 'output window, operand 0, single buffered']
    %8 = vsyncpa [#allocation3], 0
    %9 = vsyncpa [#allocation6], 0
    %10 = vsyncpa [#allocation4], 0
    // Predicated region
    $region2: #{tpu_custom_call.1} parent=1 // pred_check
      _
    $region3: #{tpu_custom_call.1} parent=1 // pred_check_branch
      %12 = sbr.rel (0) target = $region5
    $region4: #{tpu_custom_call.1} parent=1 // pred_region
      %s14 = ssub.s32 1024, 1024
      %15 = vsyncadd [#allocation3], %s14
      %s16 = sshll.u32 [#allocation2], 4
      %s17 = int_to_ptr.vmem [resolvable:$true] %s16
      %22 = dma.hbm_to_vmem [thread:$0]  %s0, 1024, %s17, [#allocation3], 64, 64, 4
    $region5: #{tpu_custom_call.1} parent=1 // pred_fallthru
      _
    // Predicated region
    $region6: #{tpu_custom_call.1} parent=1 // pred_check
      _
    $region7: #{tpu_custom_call.1} parent=1 // pred_check_branch
      %24 = sbr.rel (0) target = $region9
    $region8: #{tpu_custom_call.1} parent=1 // pred_region
      %s26 = ssub.s32 1024, 1024
      %27 = vsyncadd [#allocation6], %s26
      %s28 = sshll.u32 [#allocation5], 4
      %s29 = int_to_ptr.vmem [resolvable:$true] %s28
      %34 = dma.hbm_to_vmem [thread:$0]  %s1, 1024, %s29, [#allocation6], 64, 64, 4
    $region9: #{tpu_custom_call.1} parent=1 // pred_fallthru
      _
    // Predicated region
    $region10: #{tpu_custom_call.1} parent=1 // pred_check
      _
    $region11: #{tpu_custom_call.1} parent=1 // pred_check_branch
      %36 = sbr.rel (0) target = $region13
    $region12: #{tpu_custom_call.1} parent=1 // pred_region
      _
    $region13: #{tpu_custom_call.1} parent=1 // pred_fallthru
      _
    // Predicated region
    $region14: #{tpu_custom_call.1} parent=1 // pred_check
      _
    $region15: #{tpu_custom_call.1} parent=1 // pred_check_branch
      %38 = sbr.rel (0) target = $region17
    $region16: #{tpu_custom_call.1} parent=1 // pred_region
      %39 = dma.done [#allocation3], 1024
    $region17: #{tpu_custom_call.1} parent=1 // pred_fallthru
      _
    // Predicated region
    $region18: #{tpu_custom_call.1} parent=1 // pred_check
      _
    $region19: #{tpu_custom_call.1} parent=1 // pred_check_branch
      %41 = sbr.rel (0) target = $region21
    $region20: #{tpu_custom_call.1} parent=1 // pred_region
      %42 = dma.done [#allocation6], 1024
    $region21: #{tpu_custom_call.1} parent=1 // pred_fallthru
      _
    %v44 = vld [vmem:[#allocation2] sm:$0xf]
    %v45 = vld [vmem:[#allocation2 + $0x4] sm:$0xf]
    %v46 = vld [vmem:[#allocation2 + $0x8] sm:$0xf]
    %v47 = vld [vmem:[#allocation2 + $0xc] sm:$0xf]
    %v48 = vld [vmem:[#allocation2 + $0x10] sm:$0xf]
    %v49 = vld [vmem:[#allocation2 + $0x14] sm:$0xf]
    %v50 = vld [vmem:[#allocation2 + $0x18] sm:$0xf]
    %v51 = vld [vmem:[#allocation2 + $0x1c] sm:$0xf]
    %v52 = vld [vmem:[#allocation2 + $0x20] sm:$0xf]
    %v53 = vld [vmem:[#allocation2 + $0x24] sm:$0xf]
    %v54 = vld [vmem:[#allocation2 + $0x28] sm:$0xf]
    %v55 = vld [vmem:[#allocation2 + $0x2c] sm:$0xf]
    %v56 = vld [vmem:[#allocation2 + $0x30] sm:$0xf]
    %v57 = vld [vmem:[#allocation2 + $0x34] sm:$0xf]
    %v58 = vld [vmem:[#allocation2 + $0x38] sm:$0xf]
    %v59 = vld [vmem:[#allocation2 + $0x3c] sm:$0xf]
    %v60 = vld [vmem:[#allocation5] sm:$0xf]
    %v61 = vld [vmem:[#allocation5 + $0x4] sm:$0xf]
    %v62 = vld [vmem:[#allocation5 + $0x8] sm:$0xf]
    %v63 = vld [vmem:[#allocation5 + $0xc] sm:$0xf]
    %v64 = vld [vmem:[#allocation5 + $0x10] sm:$0xf]
    %v65 = vld [vmem:[#allocation5 + $0x14] sm:$0xf]
    %v66 = vld [vmem:[#allocation5 + $0x18] sm:$0xf]
    %v67 = vld [vmem:[#allocation5 + $0x1c] sm:$0xf]
    %v68 = vld [vmem:[#allocation5 + $0x20] sm:$0xf]
    %v69 = vld [vmem:[#allocation5 + $0x24] sm:$0xf]
    %v70 = vld [vmem:[#allocation5 + $0x28] sm:$0xf]
    %v71 = vld [vmem:[#allocation5 + $0x2c] sm:$0xf]
    %v72 = vld [vmem:[#allocation5 + $0x30] sm:$0xf]
    %v73 = vld [vmem:[#allocation5 + $0x34] sm:$0xf]
    %v74 = vld [vmem:[#allocation5 + $0x38] sm:$0xf]
    %v75 = vld [vmem:[#allocation5 + $0x3c] sm:$0xf]
    %v92 = vunpack.c.l.b16 %v44
    %v93 = vunpack.c.l.b16 %v45
    %v94 = vunpack.c.l.b16 %v46
    %v95 = vunpack.c.l.b16 %v47
    %v96 = vunpack.c.l.b16 %v48
    %v97 = vunpack.c.l.b16 %v49
    %v98 = vunpack.c.l.b16 %v50
    %v99 = vunpack.c.l.b16 %v51
    %v100 = vunpack.c.l.b16 %v52
    %v101 = vunpack.c.l.b16 %v53
    %v102 = vunpack.c.l.b16 %v54
    %v103 = vunpack.c.l.b16 %v55
    %v104 = vunpack.c.l.b16 %v56
    %v105 = vunpack.c.l.b16 %v57
    %v106 = vunpack.c.l.b16 %v58
    %v107 = vunpack.c.l.b16 %v59
    %v108 = vpack.c.b16 %v93, %v92
    %v109 = vpack.c.b16 %v95, %v94
    %v110 = vpack.c.b16 %v97, %v96
    %v111 = vpack.c.b16 %v99, %v98
    %v112 = vpack.c.b16 %v101, %v100
    %v113 = vpack.c.b16 %v103, %v102
    %v114 = vpack.c.b16 %v105, %v104
    %v115 = vpack.c.b16 %v107, %v106
    %v140 = vunpack.c.l.b16 %v60
    %v141 = vunpack.c.l.b16 %v61
    %v142 = vunpack.c.l.b16 %v62
    %v143 = vunpack.c.l.b16 %v63
    %v144 = vunpack.c.l.b16 %v64
    %v145 = vunpack.c.l.b16 %v65
    %v146 = vunpack.c.l.b16 %v66
    %v147 = vunpack.c.l.b16 %v67
    %v148 = vunpack.c.l.b16 %v68
    %v149 = vunpack.c.l.b16 %v69
    %v150 = vunpack.c.l.b16 %v70
    %v151 = vunpack.c.l.b16 %v71
    %v152 = vunpack.c.l.b16 %v72
    %v153 = vunpack.c.l.b16 %v73
    %v154 = vunpack.c.l.b16 %v74
    %v155 = vunpack.c.l.b16 %v75
    %v156 = vpack.c.b16 %v141, %v140
    %v157 = vpack.c.b16 %v143, %v142
    %v158 = vpack.c.b16 %v145, %v144
    %v159 = vpack.c.b16 %v147, %v146
    %v160 = vpack.c.b16 %v149, %v148
    %v161 = vpack.c.b16 %v151, %v150
    %v162 = vpack.c.b16 %v153, %v152
    %v163 = vpack.c.b16 %v155, %v154
    %172 = vmatprep.subr.bf16.mxu0 0
    %173 = vmatpush1.bf16.msra.mxu0 %v156
    %174 = vmatprep.subr.bf16.mxu0 0
    %175 = vmatpush1.bf16.msra.mxu0 %v157
    %176 = vmatprep.subr.bf16.mxu0 0
    %177 = vmatpush1.bf16.msra.mxu0 %v158
    %178 = vmatprep.subr.bf16.mxu0 0
    %179 = vmatpush1.bf16.msra.mxu0 %v159
    %180 = vmatprep.subr.bf16.mxu0 0
    %181 = vmatpush1.bf16.msra.mxu0 %v160
    %182 = vmatprep.subr.bf16.mxu0 0
    %183 = vmatpush1.bf16.msra.mxu0 %v161
    %184 = vmatprep.subr.bf16.mxu0 0
    %185 = vmatpush1.bf16.msra.mxu0 %v162
    %186 = vmatprep.subr.bf16.mxu0 0
    %187 = vmatpush1.bf16.msra.mxu0 %v163
    %188 = vmatprep.subr.bf16.mxu0 0
    %189 = vmatpush1.bf16.msra.mxu0 0
    %190 = vmatprep.subr.bf16.mxu0 0
    %191 = vmatpush1.bf16.msra.mxu0 0
    %192 = vmatprep.subr.bf16.mxu0 0
    %193 = vmatpush1.bf16.msra.mxu0 0
    %194 = vmatprep.subr.bf16.mxu0 0
    %195 = vmatpush1.bf16.msra.mxu0 0
    %196 = vmatprep.subr.bf16.mxu0 0
    %197 = vmatpush1.bf16.msra.mxu0 0
    %198 = vmatprep.subr.bf16.mxu0 0
    %199 = vmatpush1.bf16.msra.mxu0 0
    %200 = vmatprep.subr.bf16.mxu0 0
    %201 = vmatpush1.bf16.msra.mxu0 0
    %202 = vmatprep.subr.bf16.mxu0 0
    %203 = vmatpush1.bf16.msra.mxu0 0
    %204 = vmatprep.mubr.bf16.mxu0 0
    %205 = vmatmul.mubr.bf16.gmra.mrb[0].mxu0 %v108
    %v206 = vpop.f32.mrb[0].mxu0
    %v207 = vadd.f32 0.0, %v206
    %v208 = vpop.f32.mrb[0].mxu0
    %v209 = vpop.f32.mrb[0].mxu0
    %v210 = vadd.f32 0.0, %v209
    %v211 = vpop.f32.mrb[0].mxu0
    %212 = vmatprep.mubr.bf16.mxu0 0
    %213 = vmatmul.mubr.bf16.gmra.mrb[0].mxu0 %v109
    %v214 = vpop.f32.mrb[0].mxu0
    %v215 = vadd.f32 0.0, %v214
    %v216 = vpop.f32.mrb[0].mxu0
    %v217 = vpop.f32.mrb[0].mxu0
    %v218 = vadd.f32 0.0, %v217
    %v219 = vpop.f32.mrb[0].mxu0
    %220 = vmatprep.mubr.bf16.mxu0 0
    %221 = vmatmul.mubr.bf16.gmra.mrb[0].mxu0 %v110
    %v222 = vpop.f32.mrb[0].mxu0
    %v223 = vadd.f32 0.0, %v222
    %v224 = vpop.f32.mrb[0].mxu0
    %v225 = vpop.f32.mrb[0].mxu0
    %v226 = vadd.f32 0.0, %v225
    %v227 = vpop.f32.mrb[0].mxu0
    %228 = vmatprep.mubr.bf16.mxu0 0
    %229 = vmatmul.mubr.bf16.gmra.mrb[0].mxu0 %v111
    %v230 = vpop.f32.mrb[0].mxu0
    %v231 = vadd.f32 0.0, %v230
    %v232 = vpop.f32.mrb[0].mxu0
    %v233 = vpop.f32.mrb[0].mxu0
    %v234 = vadd.f32 0.0, %v233
    %v235 = vpop.f32.mrb[0].mxu0
    %236 = vmatprep.mubr.bf16.mxu0 0
    %237 = vmatmul.mubr.bf16.gmra.mrb[0].mxu0 %v112
    %v238 = vpop.f32.mrb[0].mxu0
    %v239 = vadd.f32 0.0, %v238
    %v240 = vpop.f32.mrb[0].mxu0
    %v241 = vpop.f32.mrb[0].mxu0
    %v242 = vadd.f32 0.0, %v241
    %v243 = vpop.f32.mrb[0].mxu0
    %244 = vmatprep.mubr.bf16.mxu0 0
    %245 = vmatmul.mubr.bf16.gmra.mrb[0].mxu0 %v113
    %v246 = vpop.f32.mrb[0].mxu0
    %v247 = vadd.f32 0.0, %v246
    %v248 = vpop.f32.mrb[0].mxu0
    %v249 = vpop.f32.mrb[0].mxu0
    %v250 = vadd.f32 0.0, %v249
    %v251 = vpop.f32.mrb[0].mxu0
    %252 = vmatprep.mubr.bf16.mxu0 0
    %253 = vmatmul.mubr.bf16.gmra.mrb[0].mxu0 %v114
    %v254 = vpop.f32.mrb[0].mxu0
    %v255 = vadd.f32 0.0, %v254
    %v256 = vpop.f32.mrb[0].mxu0
    %v257 = vpop.f32.mrb[0].mxu0
    %v258 = vadd.f32 0.0, %v257
    %v259 = vpop.f32.mrb[0].mxu0
    %260 = vmatprep.mubr.bf16.mxu0 0
    %261 = vmatmul.mubr.bf16.gmra.mrb[0].mxu0 %v115
    %v262 = vpop.f32.mrb[0].mxu0
    %v263 = vadd.f32 0.0, %v262
    %v264 = vpop.f32.mrb[0].mxu0
    %v265 = vpop.f32.mrb[0].mxu0
    %v266 = vadd.f32 0.0, %v265
    %v267 = vpop.f32.mrb[0].mxu0
    %268 = vdwg.mxu0
    %p269 = scmp.eq.s32.totalorder 0, 0
    // Predicated region
    $region22: #{tpu_custom_call.1} parent=1 // pred_check
      %p270 = pneg %p269
    $region23: #{tpu_custom_call.1} parent=1 // pred_check_branch
      %272 = sbr.rel (%p270) target = $region25
    $region24: #{tpu_custom_call.1} parent=1 // pred_region
      %v273 = vld [vmem:[%s2] sm:$0x1]
      %v275 = vlaneseq
      %v276 = vshrl.u32 %v275, 7
      %v277 = vsub.s32 0, %v276
      %v278 = vrot.slane %v273, %v277
      %v280 = vadd.f32 %v207, %v278
      %v281 = vadd.f32 %v210, %v278
      %v282 = vadd.f32 %v215, %v278
      %v283 = vadd.f32 %v218, %v278
      %v284 = vadd.f32 %v223, %v278
      %v285 = vadd.f32 %v226, %v278
      %v286 = vadd.f32 %v231, %v278
      %v287 = vadd.f32 %v234, %v278
      %v288 = vadd.f32 %v239, %v278
      %v289 = vadd.f32 %v242, %v278
      %v290 = vadd.f32 %v247, %v278
      %v291 = vadd.f32 %v250, %v278
      %v292 = vadd.f32 %v255, %v278
      %v293 = vadd.f32 %v258, %v278
      %v294 = vadd.f32 %v263, %v278
      %v295 = vadd.f32 %v266, %v278
      %296 = vst [vmem:[#allocation7] sm:$0xff] %v280
      %297 = vst [vmem:[#allocation7 + $0x8] sm:$0xff] %v281
      %298 = vst [vmem:[#allocation7 + $0x10] sm:$0xff] %v282
      %299 = vst [vmem:[#allocation7 + $0x18] sm:$0xff] %v283
      %300 = vst [vmem:[#allocation7 + $0x20] sm:$0xff] %v284
      %301 = vst [vmem:[#allocation7 + $0x28] sm:$0xff] %v285
      %302 = vst [vmem:[#allocation7 + $0x30] sm:$0xff] %v286
      %303 = vst [vmem:[#allocation7 + $0x38] sm:$0xff] %v287
      %304 = vst [vmem:[#allocation7 + $0x40] sm:$0xff] %v288
      %305 = vst [vmem:[#allocation7 + $0x48] sm:$0xff] %v289
      %306 = vst [vmem:[#allocation7 + $0x50] sm:$0xff] %v290
      %307 = vst [vmem:[#allocation7 + $0x58] sm:$0xff] %v291
      %308 = vst [vmem:[#allocation7 + $0x60] sm:$0xff] %v292
      %309 = vst [vmem:[#allocation7 + $0x68] sm:$0xff] %v293
      %310 = vst [vmem:[#allocation7 + $0x70] sm:$0xff] %v294
      %311 = vst [vmem:[#allocation7 + $0x78] sm:$0xff] %v295
    $region25: #{tpu_custom_call.1} parent=1 // pred_fallthru
      _
    %p312 = scmp.gt.s32.totalorder 0, 0
    // Predicated region
    $region26: #{tpu_custom_call.1} parent=1 // pred_check
      %p313 = pneg %p312
    $region27: #{tpu_custom_call.1} parent=1 // pred_check_branch
      %315 = sbr.rel (%p313) target = $region29
    $region28: #{tpu_custom_call.1} parent=1 // pred_region
      %v316 = vld [vmem:[#allocation7] sm:$0xff]
      %v317 = vld [vmem:[#allocation7 + $0x8] sm:$0xff]
      %v318 = vld [vmem:[#allocation7 + $0x10] sm:$0xff]
      %v319 = vld [vmem:[#allocation7 + $0x18] sm:$0xff]
      %v320 = vld [vmem:[#allocation7 + $0x20] sm:$0xff]
      %v321 = vld [vmem:[#allocation7 + $0x28] sm:$0xff]
      %v322 = vld [vmem:[#allocation7 + $0x30] sm:$0xff]
      %v323 = vld [vmem:[#allocation7 + $0x38] sm:$0xff]
      %v324 = vld [vmem:[#allocation7 + $0x40] sm:$0xff]
      %v325 = vld [vmem:[#allocation7 + $0x48] sm:$0xff]
      %v326 = vld [vmem:[#allocation7 + $0x50] sm:$0xff]
      %v327 = vld [vmem:[#allocation7 + $0x58] sm:$0xff]
      %v328 = vld [vmem:[#allocation7 + $0x60] sm:$0xff]
      %v329 = vld [vmem:[#allocation7 + $0x68] sm:$0xff]
      %v330 = vld [vmem:[#allocation7 + $0x70] sm:$0xff]
      %v331 = vld [vmem:[#allocation7 + $0x78] sm:$0xff]
      %v332 = vadd.f32 %v316, %v207
      %v333 = vadd.f32 %v317, %v210
      %v334 = vadd.f32 %v318, %v215
      %v335 = vadd.f32 %v319, %v218
      %v336 = vadd.f32 %v320, %v223
      %v337 = vadd.f32 %v321, %v226
      %v338 = vadd.f32 %v322, %v231
      %v339 = vadd.f32 %v323, %v234
      %v340 = vadd.f32 %v324, %v239
      %v341 = vadd.f32 %v325, %v242
      %v342 = vadd.f32 %v326, %v247
      %v343 = vadd.f32 %v327, %v250
      %v344 = vadd.f32 %v328, %v255
      %v345 = vadd.f32 %v329, %v258
      %v346 = vadd.f32 %v330, %v263
      %v347 = vadd.f32 %v331, %v266
      %348 = vst [vmem:[#allocation7] sm:$0xff] %v332
      %349 = vst [vmem:[#allocation7 + $0x8] sm:$0xff] %v333
      %350 = vst [vmem:[#allocation7 + $0x10] sm:$0xff] %v334
      %351 = vst [vmem:[#allocation7 + $0x18] sm:$0xff] %v335
      %352 = vst [vmem:[#allocation7 + $0x20] sm:$0xff] %v336
      %353 = vst [vmem:[#allocation7 + $0x28] sm:$0xff] %v337
      %354 = vst [vmem:[#allocation7 + $0x30] sm:$0xff] %v338
      %355 = vst [vmem:[#allocation7 + $0x38] sm:$0xff] %v339
      %356 = vst [vmem:[#allocation7 + $0x40] sm:$0xff] %v340
      %357 = vst [vmem:[#allocation7 + $0x48] sm:$0xff] %v341
      %358 = vst [vmem:[#allocation7 + $0x50] sm:$0xff] %v342
      %359 = vst [vmem:[#allocation7 + $0x58] sm:$0xff] %v343
      %360 = vst [vmem:[#allocation7 + $0x60] sm:$0xff] %v344
      %361 = vst [vmem:[#allocation7 + $0x68] sm:$0xff] %v345
      %362 = vst [vmem:[#allocation7 + $0x70] sm:$0xff] %v346
      %363 = vst [vmem:[#allocation7 + $0x78] sm:$0xff] %v347
    $region29: #{tpu_custom_call.1} parent=1 // pred_fallthru
      _
    // Predicated region
    $region30: #{tpu_custom_call.1} parent=1 // pred_check
      _
    $region31: #{tpu_custom_call.1} parent=1 // pred_check_branch
      %365 = sbr.rel (0) target = $region33
    $region32: #{tpu_custom_call.1} parent=1 // pred_region
      %s367 = ssub.s32 2048, 2048
      %368 = vsyncadd [#allocation4], %s367
      %s369 = sshll.u32 [#allocation7], 4
      %s370 = int_to_ptr.vmem [resolvable:$true] %s369
      %375 = dma.vmem_to_hbm [thread:$0]  %s370, 2048, %s3, [#allocation4], 128, 128, 8
    $region33: #{tpu_custom_call.1} parent=1 // pred_fallthru
      _
    // Predicated region
    $region34: #{tpu_custom_call.1} parent=1 // pred_check
      _
    $region35: #{tpu_custom_call.1} parent=1 // pred_check_branch
      %377 = sbr.rel (0) target = $region37
    $region36: #{tpu_custom_call.1} parent=1 // pred_region
      %378 = dma.done [#allocation4], 2048
    $region37: #{tpu_custom_call.1} parent=1 // pred_fallthru
      _
    %379 = vsyncpa [#allocation3], 1
    %380 = vsyncpa [#allocation6], 1
    %381 = vsyncpa [#allocation4], 1

</llo_original>
